<compile_context>
chip_gen: v7x
topology: tpu7x:2x2x1
jax: 0.10.0
libtpu: 0.0.40
codegen_flags: <defaults>
</compile_context>

<pallas_src>
import functools

import jax
import jax.numpy as jnp
import numpy as np
from jax.experimental import pallas as pl
from jax.experimental.pallas import tpu as pltpu

LANE = 128          # TPU lane width (last dim)
SUBLANE = 8         # f32 sublane count (second-to-last dim)
TILE_N_MAX = 512    # row tile; safe for v7x's 64 MiB VMEM at these feature widths


def _round_up(x, m):
    return ((x + m - 1) // m) * m


def _pad_to(x, shape):
    pads = [(0, t - s) for s, t in zip(x.shape, shape)]
    return jnp.pad(x, pads)


# ----------------------------- Pallas kernel --------------------------------
def sage_layer_kernel(src_ref, neigh_ref, invk_ref, w_ref, out_ref, *, apply_act):
    """Fused SageGcn for one row-tile (all hops of a layer concatenated along N).

        out = act( [src , (sum_K neigh) * inv_k] @ [W_self ; W_agg] )

    Shapes (lane-padded):
        src:   (TN, Dp)       bf16
        neigh: (TN, Kmax, Dp) bf16   (zero-padded along K; padding does not affect the sum)
        invk:  (TN, 1)        f32    (per-row 1/K; zero on padded rows)
        w:     (2*Dp, Hp)     bf16   ([W_self ; W_agg] stacked along the contraction dim)
        out:   (TN, Hp)       f32
    """
    # neighbor aggregation: sum over K (f32), then fold in the per-row 1/K (mean)
    neigh_sum = jnp.sum(neigh_ref[...].astype(jnp.float32), axis=1)        # (TN, Dp)
    aggr = (neigh_sum * invk_ref[...]).astype(jnp.bfloat16)                # (TN, Dp)

    # single MXU matmul: concat features along the (128-aligned) lane axis
    lhs = jnp.concatenate([src_ref[...], aggr], axis=-1)                   # (TN, 2*Dp)
    h = jnp.dot(lhs, w_ref[...], preferred_element_type=jnp.float32)       # (TN, Hp)

    if apply_act:
        # F.leaky_relu, default negative_slope = 0.01
        h = jnp.where(h > 0, h, 0.01 * h)
    out_ref[...] = h.astype(out_ref.dtype)


def sage_layer(src, neigh, invk, w_fused, *, apply_act, tile_n):
    """One fused GraphSage layer over all hops; row-tiled, 'parallel' grid."""
    n_pad, d_pad = src.shape
    _, k_max, _ = neigh.shape
    h_pad = w_fused.shape[1]
    grid = (n_pad // tile_n,)
    kernel = functools.partial(sage_layer_kernel, apply_act=apply_act)
    return pl.pallas_call(
        kernel,
        grid=grid,
        in_specs=[
            pl.BlockSpec((tile_n, d_pad), lambda i: (i, 0)),
            pl.BlockSpec((tile_n, k_max, d_pad), lambda i: (i, 0, 0)),
            pl.BlockSpec((tile_n, 1), lambda i: (i, 0)),
            pl.BlockSpec((2 * d_pad, h_pad), lambda i: (0, 0)),   # weights resident
        ],
        out_specs=pl.BlockSpec((tile_n, h_pad), lambda i: (i, 0)),
        out_shape=jax.ShapeDtypeStruct((n_pad, h_pad), jnp.float32),
        compiler_params=pltpu.CompilerParams(
            dimension_semantics=("parallel",)),
    )(src, neigh, invk, w_fused)


# --------------------------- parameter initialization ------------------------
def kaiming_normal(key, shape):
    # mimic torch.nn.init.kaiming_normal_ (fan_in = shape[1] for 2-D tensors)
    fan_in = shape[1]
    std = (2.0 / fan_in) ** 0.5
    return std * jax.random.normal(key, shape, dtype=jnp.float32)


def init_graphsage_params(key, input_dim, hidden_dim):
    """One SageGcn per entry of hidden_dim; last layer has no activation.

    For each layer, W_self and W_agg are stacked along the contraction dim,
    zero-padded to lane-friendly sizes, and cast to bf16 once.
    """
    dims = [input_dim] + list(hidden_dim)
    params = []
    for l in range(len(hidden_dim)):
        key, k1, k2 = jax.random.split(key, 3)
        d, h = dims[l], dims[l + 1]
        w_self = kaiming_normal(k1, (d, h))
        w_agg = kaiming_normal(k2, (d, h))
        d_pad = _round_up(d, LANE)
        h_pad = _round_up(h, LANE)
        w_fused = jnp.zeros((2 * d_pad, h_pad), jnp.float32)
        w_fused = w_fused.at[:d, :h].set(w_self)
        w_fused = w_fused.at[d_pad:d_pad + d, :h].set(w_agg)
        params.append({
            "w_self": w_self, "w_agg": w_agg,
            "w_fused": w_fused.astype(jnp.bfloat16),
            "d": d, "h": h, "d_pad": d_pad, "h_pad": h_pad,
            "act": l < len(hidden_dim) - 1,     # leaky_relu except final layer
        })
    return params


# --------------------------- GraphSage forward (JAX glue) --------------------
def graphsage_forward(params, node_features_list, num_neighbors_list):
    num_layers = len(num_neighbors_list)
    hidden = list(node_features_list)
    for l in range(num_layers):
        p = params[l]
        d, h, d_pad, h_pad = p["d"], p["h"], p["d_pad"], p["h_pad"]
        num_hops = num_layers - l
        k_max = max(num_neighbors_list[:num_hops])

        src_blocks, neigh_blocks, invk_blocks, row_sizes = [], [], [], []
        for hop in range(num_hops):
            src = hidden[hop]                                     # (n_hop, d)
            n = src.shape[0]
            k = num_neighbors_list[hop]
            neigh = hidden[hop + 1].reshape((n, k, d))            # (n_hop, k, d)
            src_blocks.append(_pad_to(src.astype(jnp.bfloat16), (n, d_pad)))
            neigh_blocks.append(_pad_to(neigh.astype(jnp.bfloat16), (n, k_max, d_pad)))
            invk_blocks.append(jnp.full((n, 1), 1.0 / k, dtype=jnp.float32))
            row_sizes.append(n)

        src_all = jnp.concatenate(src_blocks, axis=0)
        neigh_all = jnp.concatenate(neigh_blocks, axis=0)
        invk_all = jnp.concatenate(invk_blocks, axis=0)

        n_total = src_all.shape[0]
        tile_n = min(TILE_N_MAX, _round_up(n_total, SUBLANE))
        n_pad = _round_up(n_total, tile_n)
        src_all = _pad_to(src_all, (n_pad, d_pad))
        neigh_all = _pad_to(neigh_all, (n_pad, k_max, d_pad))
        invk_all = _pad_to(invk_all, (n_pad, 1))

        out = sage_layer(src_all, neigh_all, invk_all, p["w_fused"],
                         apply_act=p["act"], tile_n=tile_n)       # (n_pad, h_pad) f32

        # split rows back into per-hop tensors, keep only the valid H columns
        next_hidden = []
        off = 0
        for n in row_sizes:
            next_hidden.append(out[off:off + n, :h])
            off += n
        hidden = next_hidden
    return hidden[0]


# --------------------------- pure-JAX f32 reference --------------------------
def graphsage_reference(params, node_features_list, num_neighbors_list):
    num_layers = len(num_neighbors_list)
    hidden = list(node_features_list)
    for l in range(num_layers):
        p = params[l]
        next_hidden = []
        for hop in range(num_layers - l):
            src = hidden[hop]
            n, d = src.shape
            k = num_neighbors_list[hop]
            neigh = hidden[hop + 1].reshape((n, k, d))
            h = src @ p["w_self"] + jnp.mean(neigh, axis=1) @ p["w_agg"]
            if p["act"]:
                h = jnp.where(h > 0, h, 0.01 * h)
            next_hidden.append(h)
        hidden = next_hidden
    return hidden[0]


# ----------------------------------- main ------------------------------------
if __name__ == "__main__":
    input_dim = 16
    hidden_dim = [32, 8]
    num_neighbors_list = [3, 2]
    n0 = 4  # number of source nodes

    key = jax.random.PRNGKey(0)
    key, kp = jax.random.split(key)
    params = init_graphsage_params(kp, input_dim, hidden_dim)

    # node_features_list: layer-0 nodes, their sampled 1-hop and 2-hop neighbors
    sizes = [n0]
    for k in num_neighbors_list:
        sizes.append(sizes[-1] * k)           # [4, 12, 24]
    node_features_list = []
    for s in sizes:
        key, kx = jax.random.split(key)
        node_features_list.append(
            jax.random.normal(kx, (s, input_dim), dtype=jnp.float32))

    out = graphsage_forward(params, node_features_list, num_neighbors_list)
    out = jax.block_until_ready(out)
    assert out.shape == (n0, hidden_dim[-1]), out.shape

    # correctness vs. f32 reference (kernel feeds bf16 to the MXU -> loose tolerance)
    ref = graphsage_reference(params, node_features_list, num_neighbors_list)
    ref = jax.block_until_ready(ref)
    assert np.allclose(np.asarray(out), np.asarray(ref), rtol=0.1, atol=0.1), (
        np.max(np.abs(np.asarray(out) - np.asarray(ref))))

    print("KERNEL_OK")
</pallas_src>

<mosaic_0001>
module attributes {stable_mosaic.version = 11 : i64} {
  func.func @sage_layer_kernel(%arg0: i32, %arg1: memref<16x128xbf16, #tpu.memory_space<vmem>>, %arg2: memref<16x3x128xbf16, #tpu.memory_space<vmem>>, %arg3: memref<16x1xf32, #tpu.memory_space<vmem>>, %arg4: memref<256x128xbf16, #tpu.memory_space<vmem>>, %arg5: memref<16x128xf32, #tpu.memory_space<vmem>>) attributes {dimension_semantics = [#tpu.dimension_semantics<parallel>], iteration_bounds = array<i64: 1>, scalar_prefetch = 0 : i64, scratch_operands = 0 : i64, tpu.core_type = #tpu.core_type<tc>, window_params = [{transform_indices = @transform_0, window_bounds = array<i64: 16, 128>}, {transform_indices = @transform_1, window_bounds = array<i64: 16, 3, 128>}, {transform_indices = @transform_2, window_bounds = array<i64: 16, 1>}, {pipeline_mode = #tpu.pipeline_mode<synchronous>, transform_indices = @transform_3, window_bounds = array<i64: 256, 128>}, {transform_indices = @transform_4, window_bounds = array<i64: 16, 128>}]} {
    %c0 = arith.constant 0 : index
    %c0_0 = arith.constant 0 : index
    %c0_1 = arith.constant 0 : index
    %0 = vector.load %arg2[%c0, %c0_0, %c0_1] : memref<16x3x128xbf16, #tpu.memory_space<vmem>>, vector<16x3x128xbf16>
    %1 = arith.extf %0 : vector<16x3x128xbf16> to vector<16x3x128xf32>
    %cst = arith.constant dense<0.000000e+00> : vector<16x128xf32>
    %2 = vector.multi_reduction <add>, %1, %cst [1] : vector<16x3x128xf32> to vector<16x128xf32>
    %c0_2 = arith.constant 0 : index
    %c0_3 = arith.constant 0 : index
    %3 = vector.load %arg3[%c0_2, %c0_3] : memref<16x1xf32, #tpu.memory_space<vmem>>, vector<16x1xf32>
    %4 = vector.broadcast %3 : vector<16x1xf32> to vector<16x128xf32>
    %5 = arith.mulf %2, %4 : vector<16x128xf32>
    %6 = arith.truncf %5 : vector<16x128xf32> to vector<16x128xbf16>
    %c0_4 = arith.constant 0 : index
    %c0_5 = arith.constant 0 : index
    %7 = vector.load %arg1[%c0_4, %c0_5] : memref<16x128xbf16, #tpu.memory_space<vmem>>, vector<16x128xbf16>
    %8 = tpu.concatenate %7, %6 in 1 : vector<16x128xbf16>, vector<16x128xbf16> -> vector<16x256xbf16>
    %c0_6 = arith.constant 0 : index
    %c0_7 = arith.constant 0 : index
    %9 = vector.load %arg4[%c0_6, %c0_7] : memref<256x128xbf16, #tpu.memory_space<vmem>>, vector<256x128xbf16>
    %cst_8 = arith.constant dense<0.000000e+00> : vector<16x128xf32>
    %10 = tpu.matmul %8, %9, %cst_8 {dimension_numbers = #tpu.dot_dimension_numbers<[1], [0], [0], [1], [0, 0, 1, 1], [], []>} : vector<16x256xbf16>, vector<256x128xbf16>, vector<16x128xf32> -> vector<16x128xf32>
    %cst_9 = arith.constant 0.000000e+00 : f32
    %11 = vector.broadcast %cst_9 : f32 to vector<16x128xf32>
    %12 = arith.cmpf ogt, %10, %11 : vector<16x128xf32>
    %cst_10 = arith.constant 0.00999999977 : f32
    %13 = vector.broadcast %cst_10 : f32 to vector<16x128xf32>
    %14 = arith.mulf %13, %10 : vector<16x128xf32>
    %15 = arith.select %12, %10, %14 : vector<16x128xi1>, vector<16x128xf32>
    %c0_11 = arith.constant 0 : index
    %c0_12 = arith.constant 0 : index
    %16 = vector.load %arg5[%c0_11, %c0_12] : memref<16x128xf32, #tpu.memory_space<vmem>>, vector<16x128xf32>
    tpu.vector_store %arg5[%c0_11, %c0_12], %15 {strides = array<i32>} : memref<16x128xf32, #tpu.memory_space<vmem>>, vector<16x128xf32>,
    return
  }
  func.func @transform_0(%arg0: i32) -> (i32, i32) {
    %c0_i32 = arith.constant 0 : i32
    %c0_i32_0 = arith.constant 0 : i32
    return %arg0, %c0_i32 : i32, i32
  }
  func.func @transform_1(%arg0: i32) -> (i32, i32, i32) {
    %c0_i32 = arith.constant 0 : i32
    %c0_i32_0 = arith.constant 0 : i32
    %c0_i32_1 = arith.constant 0 : i32
    return %arg0, %c0_i32, %c0_i32_0 : i32, i32, i32
  }
  func.func @transform_2(%arg0: i32) -> (i32, i32) {
    %c0_i32 = arith.constant 0 : i32
    %c0_i32_0 = arith.constant 0 : i32
    return %arg0, %c0_i32 : i32, i32
  }
  func.func @transform_3(%arg0: i32) -> (i32, i32) {
    %c0_i32 = arith.constant 0 : i32
    %c0_i32_0 = arith.constant 0 : i32
    %c0_i32_1 = arith.constant 0 : i32
    return %c0_i32, %c0_i32_0 : i32, i32
  }
  func.func @transform_4(%arg0: i32) -> (i32, i32) {
    %c0_i32 = arith.constant 0 : i32
    %c0_i32_0 = arith.constant 0 : i32
    return %arg0, %c0_i32 : i32, i32
  }
}

</mosaic_0001>

<llo_original>
// kernel: tpu_custom_call.1
$region0: #{tpu_custom_call.1}
  #allocation0 [shape = 'u32[]', space=smem, size = 0x4, offset = 0x4, fixed_abs, tag = 'smem constant byte address 0x4 - core index']
  #allocation1 [shape = 'u32[144,128]{1,0:T(1,128)}', space=vmem, size = 0x12000, scoped, tag = 'internal scratch']
  %s0 = inlined_call_operand.vmem [shape: bf16[16,128], index: 0, kind: input, shape index: {}]
  %s1 = inlined_call_operand.vmem [shape: bf16[16,3,128], index: 1, kind: input, shape index: {}]
  %s2 = inlined_call_operand.vmem [shape: f32[16,1], index: 2, kind: input, shape index: {}]
  %s3 = inlined_call_operand.hbm [shape: bf16[256,128], index: 3, kind: input, shape index: {}]
  %s4 = inlined_call_operand.hbm [shape: f32[16,128], index: 4, kind: output, shape index: {}]
  %s5 = sld [smem:[#allocation0]]
  $region30: #{tpu_custom_call.1} parent=0
    _
  %s7 = ssub.s32 1, %s5
  %s8 = scalar_select 0, %s7, %s5
  $region1: #{tpu_custom_call.1} parent=0
    #allocation2 [shape = 'u8[65536]{0}', space=vmem, size = 0x10000, scoped, tag = 'input window, operand 3, single buffered']
    #allocation3 [shape = 's32[1]{0}', space=sflag, size = 0x4, scoped, tag = 'scoped memory for tpu_custom_call.1']
    #allocation4 [shape = 's32[1]{0}', space=sflag, size = 0x4, scoped, tag = 'scoped memory for tpu_custom_call.1']
    #allocation5 [shape = 'u8[8192]{0}', space=vmem, size = 0x2000, scoped, tag = 'output window, operand 0, single buffered']
    %9 = vsyncpa [#allocation3], 0
    %10 = vsyncpa [#allocation4], 0
    // Predicated region
    $region2: #{tpu_custom_call.1} parent=1 // pred_check
      _
    $region3: #{tpu_custom_call.1} parent=1 // pred_check_branch
      %12 = sbr.rel (0) target = $region5
    $region4: #{tpu_custom_call.1} parent=1 // pred_region
      _
    $region5: #{tpu_custom_call.1} parent=1 // pred_fallthru
      _
    // Predicated region
    $region6: #{tpu_custom_call.1} parent=1 // pred_check
      _
    $region7: #{tpu_custom_call.1} parent=1 // pred_check_branch
      %14 = sbr.rel (0) target = $region9
    $region8: #{tpu_custom_call.1} parent=1 // pred_region
      _
    $region9: #{tpu_custom_call.1} parent=1 // pred_fallthru
      _
    // Predicated region
    $region10: #{tpu_custom_call.1} parent=1 // pred_check
      _
    $region11: #{tpu_custom_call.1} parent=1 // pred_check_branch
      %16 = sbr.rel (0) target = $region13
    $region12: #{tpu_custom_call.1} parent=1 // pred_region
      _
    $region13: #{tpu_custom_call.1} parent=1 // pred_fallthru
      _
    // Predicated region
    $region14: #{tpu_custom_call.1} parent=1 // pred_check
      _
    $region15: #{tpu_custom_call.1} parent=1 // pred_check_branch
      %18 = sbr.rel (0) target = $region17
    $region16: #{tpu_custom_call.1} parent=1 // pred_region
      %s20 = ssub.s32 2048, 2048
      %21 = vsyncadd [#allocation3], %s20
      %s22 = sshll.u32 [#allocation2], 4
      %s23 = int_to_ptr.vmem [resolvable:$true] %s22
      %28 = dma.hbm_to_vmem [thread:$0]  %s3, 2048, %s23, [#allocation3], 64, 64, 4
    $region17: #{tpu_custom_call.1} parent=1 // pred_fallthru
      _
    // Predicated region
    $region18: #{tpu_custom_call.1} parent=1 // pred_check
      _
    $region19: #{tpu_custom_call.1} parent=1 // pred_check_branch
      %30 = sbr.rel (0) target = $region21
    $region20: #{tpu_custom_call.1} parent=1 // pred_region
      %31 = dma.done [#allocation3], 2048
    $region21: #{tpu_custom_call.1} parent=1 // pred_fallthru
      _
    %v33 = vld [vmem:[%s1] sm:$0x3]
    %v34 = vld [vmem:[%s1 + $0x2] sm:$0x3]
    %v35 = vld [vmem:[%s1 + $0x4] sm:$0x3]
    %v36 = vld [vmem:[%s1 + $0x6] sm:$0x3]
    %v37 = vld [vmem:[%s1 + $0x8] sm:$0x3]
    %v38 = vld [vmem:[%s1 + $0xa] sm:$0x3]
    %v39 = vld [vmem:[%s1 + $0xc] sm:$0x3]
    %v40 = vld [vmem:[%s1 + $0xe] sm:$0x3]
    %v41 = vld [vmem:[%s1 + $0x10] sm:$0x3]
    %v42 = vld [vmem:[%s1 + $0x12] sm:$0x3]
    %v43 = vld [vmem:[%s1 + $0x14] sm:$0x3]
    %v44 = vld [vmem:[%s1 + $0x16] sm:$0x3]
    %v45 = vld [vmem:[%s1 + $0x18] sm:$0x3]
    %v46 = vld [vmem:[%s1 + $0x1a] sm:$0x3]
    %v47 = vld [vmem:[%s1 + $0x1c] sm:$0x3]
    %v48 = vld [vmem:[%s1 + $0x1e] sm:$0x3]
    %v49 = vunpack.c.l.bf16 %v33
    %v50 = vunpack.c.l.bf16 %v34
    %v51 = vunpack.c.l.bf16 %v35
    %v52 = vunpack.c.l.bf16 %v36
    %v53 = vunpack.c.l.bf16 %v37
    %v54 = vunpack.c.l.bf16 %v38
    %v55 = vunpack.c.l.bf16 %v39
    %v56 = vunpack.c.l.bf16 %v40
    %v57 = vunpack.c.l.bf16 %v41
    %v58 = vunpack.c.l.bf16 %v42
    %v59 = vunpack.c.l.bf16 %v43
    %v60 = vunpack.c.l.bf16 %v44
    %v61 = vunpack.c.l.bf16 %v45
    %v62 = vunpack.c.l.bf16 %v46
    %v63 = vunpack.c.l.bf16 %v47
    %v64 = vunpack.c.l.bf16 %v48
    %vm65 = vcmask 1042432
    %v66 = vsel %vm65, %v49, 0.0
    %v67 = vrot.slane %v66, 4
    %v68 = vadd.f32 %v66, %v67
    %v69 = vrot.slane %v68, 2
    %v70 = vadd.f32 %v68, %v69
    %v71 = vrot.slane %v70, 1
    %v72 = vadd.f32 %v70, %v71
    %v73 = vsel %vm65, %v50, 0.0
    %v74 = vrot.slane %v73, 4
    %v75 = vadd.f32 %v73, %v74
    %v76 = vrot.slane %v75, 2
    %v77 = vadd.f32 %v75, %v76
    %v78 = vrot.slane %v77, 1
    %v79 = vadd.f32 %v77, %v78
    %v80 = vsel %vm65, %v51, 0.0
    %v81 = vrot.slane %v80, 4
    %v82 = vadd.f32 %v80, %v81
    %v83 = vrot.slane %v82, 2
    %v84 = vadd.f32 %v82, %v83
    %v85 = vrot.slane %v84, 1
    %v86 = vadd.f32 %v84, %v85
    %v87 = vsel %vm65, %v52, 0.0
    %v88 = vrot.slane %v87, 4
    %v89 = vadd.f32 %v87, %v88
    %v90 = vrot.slane %v89, 2
    %v91 = vadd.f32 %v89, %v90
    %v92 = vrot.slane %v91, 1
    %v93 = vadd.f32 %v91, %v92
    %v94 = vsel %vm65, %v53, 0.0
    %v95 = vrot.slane %v94, 4
    %v96 = vadd.f32 %v94, %v95
    %v97 = vrot.slane %v96, 2
    %v98 = vadd.f32 %v96, %v97
    %v99 = vrot.slane %v98, 1
    %v100 = vadd.f32 %v98, %v99
    %v101 = vsel %vm65, %v54, 0.0
    %v102 = vrot.slane %v101, 4
    %v103 = vadd.f32 %v101, %v102
    %v104 = vrot.slane %v103, 2
    %v105 = vadd.f32 %v103, %v104
    %v106 = vrot.slane %v105, 1
    %v107 = vadd.f32 %v105, %v106
    %v108 = vsel %vm65, %v55, 0.0
    %v109 = vrot.slane %v108, 4
    %v110 = vadd.f32 %v108, %v109
    %v111 = vrot.slane %v110, 2
    %v112 = vadd.f32 %v110, %v111
    %v113 = vrot.slane %v112, 1
    %v114 = vadd.f32 %v112, %v113
    %v115 = vsel %vm65, %v56, 0.0
    %v116 = vrot.slane %v115, 4
    %v117 = vadd.f32 %v115, %v116
    %v118 = vrot.slane %v117, 2
    %v119 = vadd.f32 %v117, %v118
    %v120 = vrot.slane %v119, 1
    %v121 = vadd.f32 %v119, %v120
    %v122 = vsel %vm65, %v57, 0.0
    %v123 = vrot.slane %v122, 4
    %v124 = vadd.f32 %v122, %v123
    %v125 = vrot.slane %v124, 2
    %v126 = vadd.f32 %v124, %v125
    %v127 = vrot.slane %v126, 1
    %v128 = vadd.f32 %v126, %v127
    %v129 = vsel %vm65, %v58, 0.0
    %v130 = vrot.slane %v129, 4
    %v131 = vadd.f32 %v129, %v130
    %v132 = vrot.slane %v131, 2
    %v133 = vadd.f32 %v131, %v132
    %v134 = vrot.slane %v133, 1
    %v135 = vadd.f32 %v133, %v134
    %v136 = vsel %vm65, %v59, 0.0
    %v137 = vrot.slane %v136, 4
    %v138 = vadd.f32 %v136, %v137
    %v139 = vrot.slane %v138, 2
    %v140 = vadd.f32 %v138, %v139
    %v141 = vrot.slane %v140, 1
    %v142 = vadd.f32 %v140, %v141
    %v143 = vsel %vm65, %v60, 0.0
    %v144 = vrot.slane %v143, 4
    %v145 = vadd.f32 %v143, %v144
    %v146 = vrot.slane %v145, 2
    %v147 = vadd.f32 %v145, %v146
    %v148 = vrot.slane %v147, 1
    %v149 = vadd.f32 %v147, %v148
    %v150 = vsel %vm65, %v61, 0.0
    %v151 = vrot.slane %v150, 4
    %v152 = vadd.f32 %v150, %v151
    %v153 = vrot.slane %v152, 2
    %v154 = vadd.f32 %v152, %v153
    %v155 = vrot.slane %v154, 1
    %v156 = vadd.f32 %v154, %v155
    %v157 = vsel %vm65, %v62, 0.0
    %v158 = vrot.slane %v157, 4
    %v159 = vadd.f32 %v157, %v158
    %v160 = vrot.slane %v159, 2
    %v161 = vadd.f32 %v159, %v160
    %v162 = vrot.slane %v161, 1
    %v163 = vadd.f32 %v161, %v162
    %v164 = vsel %vm65, %v63, 0.0
    %v165 = vrot.slane %v164, 4
    %v166 = vadd.f32 %v164, %v165
    %v167 = vrot.slane %v166, 2
    %v168 = vadd.f32 %v166, %v167
    %v169 = vrot.slane %v168, 1
    %v170 = vadd.f32 %v168, %v169
    %v171 = vsel %vm65, %v64, 0.0
    %v172 = vrot.slane %v171, 4
    %v173 = vadd.f32 %v171, %v172
    %v174 = vrot.slane %v173, 2
    %v175 = vadd.f32 %v173, %v174
    %v176 = vrot.slane %v175, 1
    %v177 = vadd.f32 %v175, %v176
    %v178 = vld [vmem:[%s2] sm:$0xff]
    %v179 = vld [vmem:[%s2 + $0x8] sm:$0xff]
    %181 = vset.pattern.permute.xlu0 0
    %182 = vperm.xlu0 %181, %v178
    %v183 = vpop.permute.xlu0 %182
    %185 = vset.pattern.permute.xlu0 0
    %186 = vperm.xlu0 %185, %v179
    %v187 = vpop.permute.xlu0 %186
    %v188 = vrot.slane %v183, 1
    %v189 = vrot.slane %v183, 2
    %v190 = vrot.slane %v183, 3
    %v191 = vrot.slane %v183, 4
    %v192 = vrot.slane %v183, 5
    %v193 = vrot.slane %v183, 6
    %v194 = vrot.slane %v183, 7
    %v195 = vrot.slane %v187, 1
    %v196 = vrot.slane %v187, 2
    %v197 = vrot.slane %v187, 3
    %v198 = vrot.slane %v187, 4
    %v199 = vrot.slane %v187, 5
    %v200 = vrot.slane %v187, 6
    %v201 = vrot.slane %v187, 7
    %v218 = vmul.f32 %v72, %v183
    %v219 = vmul.f32 %v79, %v188
    %v220 = vmul.f32 %v86, %v189
    %v221 = vmul.f32 %v93, %v190
    %v222 = vmul.f32 %v100, %v191
    %v223 = vmul.f32 %v107, %v192
    %v224 = vmul.f32 %v114, %v193
    %v225 = vmul.f32 %v121, %v194
    %v226 = vmul.f32 %v128, %v187
    %v227 = vmul.f32 %v135, %v195
    %v228 = vmul.f32 %v142, %v196
    %v229 = vmul.f32 %v149, %v197
    %v230 = vmul.f32 %v156, %v198
    %v231 = vmul.f32 %v163, %v199
    %v232 = vmul.f32 %v170, %v200
    %v233 = vmul.f32 %v177, %v201
    %v234 = vpack.c.bf16 %v218, %v218
    %v235 = vpack.c.bf16 %v219, %v219
    %v236 = vpack.c.bf16 %v220, %v220
    %v237 = vpack.c.bf16 %v221, %v221
    %v238 = vpack.c.bf16 %v222, %v222
    %v239 = vpack.c.bf16 %v223, %v223
    %v240 = vpack.c.bf16 %v224, %v224
    %v241 = vpack.c.bf16 %v225, %v225
    %v242 = vpack.c.bf16 %v226, %v226
    %v243 = vpack.c.bf16 %v227, %v227
    %v244 = vpack.c.bf16 %v228, %v228
    %v245 = vpack.c.bf16 %v229, %v229
    %v246 = vpack.c.bf16 %v230, %v230
    %v247 = vpack.c.bf16 %v231, %v231
    %v248 = vpack.c.bf16 %v232, %v232
    %v249 = vpack.c.bf16 %v233, %v233
    %v250 = vld [vmem:[%s0] sm:$0xf]
    %v251 = vld [vmem:[%s0 + $0x4] sm:$0xf]
    %v254 = vunpack.c.l.b16 %v250
    %v255 = vunpack.c.l.b16 %v251
    %v256 = vpack.c.b16 %v255, %v254
    %v274 = vunpack.c.l.b16 %v234
    %v275 = vunpack.c.l.b16 %v235
    %v276 = vunpack.c.l.b16 %v236
    %v277 = vunpack.c.l.b16 %v237
    %v278 = vunpack.c.l.b16 %v238
    %v279 = vunpack.c.l.b16 %v239
    %v280 = vunpack.c.l.b16 %v240
    %v281 = vunpack.c.l.b16 %v241
    %v282 = vunpack.c.l.b16 %v242
    %v283 = vunpack.c.l.b16 %v243
    %v284 = vunpack.c.l.b16 %v244
    %v285 = vunpack.c.l.b16 %v245
    %v286 = vunpack.c.l.b16 %v246
    %v287 = vunpack.c.l.b16 %v247
    %v288 = vunpack.c.l.b16 %v248
    %v289 = vunpack.c.l.b16 %v249
    %v290 = vrot.slane %v275, 7
    %vm291 = vcmask 1041409
    %v292 = vsel %vm291, %v290, %v274
    %v293 = vrot.slane %v276, 6
    %vm294 = vcmask 1042434
    %v295 = vsel %vm294, %v293, %v292
    %v296 = vrot.slane %v277, 5
    %vm297 = vcmask 1043459
    %v298 = vsel %vm297, %v296, %v295
    %v299 = vrot.slane %v278, 4
    %vm300 = vcmask 1044484
    %v301 = vsel %vm300, %v299, %v298
    %v302 = vrot.slane %v279, 3
    %vm303 = vcmask 1045509
    %v304 = vsel %vm303, %v302, %v301
    %v305 = vrot.slane %v280, 2
    %vm306 = vcmask 1046534
    %v307 = vsel %vm306, %v305, %v304
    %v308 = vrot.slane %v281, 1
    %vm309 = vcmask 1047559
    %v310 = vsel %vm309, %v308, %v307
    %v311 = vrot.slane %v283, 7
    %v312 = vsel %vm291, %v311, %v282
    %v313 = vrot.slane %v284, 6
    %v314 = vsel %vm294, %v313, %v312
    %v315 = vrot.slane %v285, 5
    %v316 = vsel %vm297, %v315, %v314
    %v317 = vrot.slane %v286, 4
    %v318 = vsel %vm300, %v317, %v316
    %v319 = vrot.slane %v287, 3
    %v320 = vsel %vm303, %v319, %v318
    %v321 = vrot.slane %v288, 2
    %v322 = vsel %vm306, %v321, %v320
    %v323 = vrot.slane %v289, 1
    %v324 = vsel %vm309, %v323, %v322
    %v325 = vpack.c.b16 %v324, %v310
    %v327 = vld [vmem:[#allocation2] sm:$0xf]
    %v328 = vld [vmem:[#allocation2 + $0x4] sm:$0xf]
    %v329 = vld [vmem:[#allocation2 + $0x8] sm:$0xf]
    %v330 = vld [vmem:[#allocation2 + $0xc] sm:$0xf]
    %v331 = vld [vmem:[#allocation2 + $0x10] sm:$0xf]
    %v332 = vld [vmem:[#allocation2 + $0x14] sm:$0xf]
    %v333 = vld [vmem:[#allocation2 + $0x18] sm:$0xf]
    %v334 = vld [vmem:[#allocation2 + $0x1c] sm:$0xf]
    %v335 = vld [vmem:[#allocation2 + $0x20] sm:$0xf]
    %v336 = vld [vmem:[#allocation2 + $0x24] sm:$0xf]
    %v337 = vld [vmem:[#allocation2 + $0x28] sm:$0xf]
    %v338 = vld [vmem:[#allocation2 + $0x2c] sm:$0xf]
    %v339 = vld [vmem:[#allocation2 + $0x30] sm:$0xf]
    %v340 = vld [vmem:[#allocation2 + $0x34] sm:$0xf]
    %v341 = vld [vmem:[#allocation2 + $0x38] sm:$0xf]
    %v342 = vld [vmem:[#allocation2 + $0x3c] sm:$0xf]
    %v343 = vld [vmem:[#allocation2 + $0x40] sm:$0xf]
    %v344 = vld [vmem:[#allocation2 + $0x44] sm:$0xf]
    %v345 = vld [vmem:[#allocation2 + $0x48] sm:$0xf]
    %v346 = vld [vmem:[#allocation2 + $0x4c] sm:$0xf]
    %v347 = vld [vmem:[#allocation2 + $0x50] sm:$0xf]
    %v348 = vld [vmem:[#allocation2 + $0x54] sm:$0xf]
    %v349 = vld [vmem:[#allocation2 + $0x58] sm:$0xf]
    %v350 = vld [vmem:[#allocation2 + $0x5c] sm:$0xf]
    %v351 = vld [vmem:[#allocation2 + $0x60] sm:$0xf]
    %v352 = vld [vmem:[#allocation2 + $0x64] sm:$0xf]
    %v353 = vld [vmem:[#allocation2 + $0x68] sm:$0xf]
    %v354 = vld [vmem:[#allocation2 + $0x6c] sm:$0xf]
    %v355 = vld [vmem:[#allocation2 + $0x70] sm:$0xf]
    %v356 = vld [vmem:[#allocation2 + $0x74] sm:$0xf]
    %v357 = vld [vmem:[#allocation2 + $0x78] sm:$0xf]
    %v358 = vld [vmem:[#allocation2 + $0x7c] sm:$0xf]
    %v391 = vunpack.c.l.b16 %v327
    %v392 = vunpack.c.l.b16 %v328
    %v393 = vunpack.c.l.b16 %v329
    %v394 = vunpack.c.l.b16 %v330
    %v395 = vunpack.c.l.b16 %v331
    %v396 = vunpack.c.l.b16 %v332
    %v397 = vunpack.c.l.b16 %v333
    %v398 = vunpack.c.l.b16 %v334
    %v399 = vunpack.c.l.b16 %v335
    %v400 = vunpack.c.l.b16 %v336
    %v401 = vunpack.c.l.b16 %v337
    %v402 = vunpack.c.l.b16 %v338
    %v403 = vunpack.c.l.b16 %v339
    %v404 = vunpack.c.l.b16 %v340
    %v405 = vunpack.c.l.b16 %v341
    %v406 = vunpack.c.l.b16 %v342
    %v407 = vunpack.c.l.b16 %v343
    %v408 = vunpack.c.l.b16 %v344
    %v409 = vunpack.c.l.b16 %v345
    %v410 = vunpack.c.l.b16 %v346
    %v411 = vunpack.c.l.b16 %v347
    %v412 = vunpack.c.l.b16 %v348
    %v413 = vunpack.c.l.b16 %v349
    %v414 = vunpack.c.l.b16 %v350
    %v415 = vunpack.c.l.b16 %v351
    %v416 = vunpack.c.l.b16 %v352
    %v417 = vunpack.c.l.b16 %v353
    %v418 = vunpack.c.l.b16 %v354
    %v419 = vunpack.c.l.b16 %v355
    %v420 = vunpack.c.l.b16 %v356
    %v421 = vunpack.c.l.b16 %v357
    %v422 = vunpack.c.l.b16 %v358
    %v423 = vpack.c.b16 %v392, %v391
    %v424 = vpack.c.b16 %v394, %v393
    %v425 = vpack.c.b16 %v396, %v395
    %v426 = vpack.c.b16 %v398, %v397
    %v427 = vpack.c.b16 %v400, %v399
    %v428 = vpack.c.b16 %v402, %v401
    %v429 = vpack.c.b16 %v404, %v403
    %v430 = vpack.c.b16 %v406, %v405
    %v431 = vpack.c.b16 %v408, %v407
    %v432 = vpack.c.b16 %v410, %v409
    %v433 = vpack.c.b16 %v412, %v411
    %v434 = vpack.c.b16 %v414, %v413
    %v435 = vpack.c.b16 %v416, %v415
    %v436 = vpack.c.b16 %v418, %v417
    %v437 = vpack.c.b16 %v420, %v419
    %v438 = vpack.c.b16 %v422, %v421
    %455 = vmatprep.subr.bf16.mxu0 0
    %456 = vmatpush1.bf16.msra.mxu0 %v423
    %457 = vmatprep.subr.bf16.mxu0 0
    %458 = vmatpush1.bf16.msra.mxu0 %v424
    %459 = vmatprep.subr.bf16.mxu0 0
    %460 = vmatpush1.bf16.msra.mxu0 %v425
    %461 = vmatprep.subr.bf16.mxu0 0
    %462 = vmatpush1.bf16.msra.mxu0 %v426
    %463 = vmatprep.subr.bf16.mxu0 0
    %464 = vmatpush1.bf16.msra.mxu0 %v427
    %465 = vmatprep.subr.bf16.mxu0 0
    %466 = vmatpush1.bf16.msra.mxu0 %v428
    %467 = vmatprep.subr.bf16.mxu0 0
    %468 = vmatpush1.bf16.msra.mxu0 %v429
    %469 = vmatprep.subr.bf16.mxu0 0
    %470 = vmatpush1.bf16.msra.mxu0 %v430
    %471 = vmatprep.subr.bf16.mxu0 0
    %472 = vmatpush1.bf16.msra.mxu0 %v431
    %473 = vmatprep.subr.bf16.mxu0 0
    %474 = vmatpush1.bf16.msra.mxu0 %v432
    %475 = vmatprep.subr.bf16.mxu0 0
    %476 = vmatpush1.bf16.msra.mxu0 %v433
    %477 = vmatprep.subr.bf16.mxu0 0
    %478 = vmatpush1.bf16.msra.mxu0 %v434
    %479 = vmatprep.subr.bf16.mxu0 0
    %480 = vmatpush1.bf16.msra.mxu0 %v435
    %481 = vmatprep.subr.bf16.mxu0 0
    %482 = vmatpush1.bf16.msra.mxu0 %v436
    %483 = vmatprep.subr.bf16.mxu0 0
    %484 = vmatpush1.bf16.msra.mxu0 %v437
    %485 = vmatprep.subr.bf16.mxu0 0
    %486 = vmatpush1.bf16.msra.mxu0 %v438
    %487 = vmatprep.mubr.bf16.mxu0 %v325
    %488 = vmatmul.mubr.bf16.gmra.mrb[0].mxu0 %v256
    %v489 = vpop.f32.mrb[0].mxu0
    %v490 = vadd.f32 0.0, %v489
    %v491 = vpop.f32.mrb[0].mxu0
    %v492 = vpop.f32.mrb[0].mxu0
    %v493 = vadd.f32 0.0, %v492
    %v494 = vpop.f32.mrb[0].mxu0
    %495 = vdwg.mxu0
    %vm496 = vcmp.gt.f32.partialorder %v490, 0.0
    %vm497 = vcmp.gt.f32.partialorder %v493, 0.0
    %v498 = vmul.f32 %v490, 0.01
    %v499 = vmul.f32 %v493, 0.01
    %v500 = vsel %vm496, %v490, %v498
    %v501 = vsel %vm497, %v493, %v499
    %502 = vst [vmem:[#allocation5] sm:$0xff] %v500
    %503 = vst [vmem:[#allocation5 + $0x8] sm:$0xff] %v501
    // Predicated region
    $region22: #{tpu_custom_call.1} parent=1 // pred_check
      _
    $region23: #{tpu_custom_call.1} parent=1 // pred_check_branch
      %505 = sbr.rel (0) target = $region25
    $region24: #{tpu_custom_call.1} parent=1 // pred_region
      %s507 = ssub.s32 256, 256
      %508 = vsyncadd [#allocation4], %s507
      %s509 = sshll.u32 [#allocation5], 4
      %s510 = int_to_ptr.vmem [resolvable:$true] %s509
      %515 = dma.vmem_to_hbm [thread:$0]  %s510, 256, %s4, [#allocation4], 128, 128, 8
    $region25: #{tpu_custom_call.1} parent=1 // pred_fallthru
      _
    // Predicated region
    $region26: #{tpu_custom_call.1} parent=1 // pred_check
      _
    $region27: #{tpu_custom_call.1} parent=1 // pred_check_branch
      %517 = sbr.rel (0) target = $region29
    $region28: #{tpu_custom_call.1} parent=1 // pred_region
      %518 = dma.done [#allocation4], 256
    $region29: #{tpu_custom_call.1} parent=1 // pred_fallthru
      _
    %519 = vsyncpa [#allocation3], 1
    %520 = vsyncpa [#allocation4], 1

</llo_original>
